<compile_context>
chip_gen: v6e
topology: v6e:2x2x1
jax: 0.10.0
libtpu: 0.0.40
codegen_flags: <defaults>
</compile_context>

<pallas_src>
import jax
import jax.numpy as jnp
from jax.experimental import pallas as pl
from jax.experimental.pallas import tpu as pltpu


def attention_st_kernel(x1_ref, x2_ref, o_ref):
    # x1_ref: (TB, C, 1)   channel-first state token(s)      (native layout)
    # x2_ref: (TB, C, TN)  channel-first feature tokens      (native layout)
    # o_ref : (TB, TN, C)  token-major output == attn * x_2^T
    eps = 1e-12
    q_cn = x1_ref[...].astype(jnp.float32)        # (TB, C, 1)
    kv_cn = x2_ref[...].astype(jnp.float32)       # (TB, C, TN)

    # C-axis (sublane) reductions; normalized k is never materialized.
    q_norm = jnp.sqrt(jnp.sum(q_cn * q_cn, axis=1, keepdims=True))    # (TB, 1, 1)
    k_norm = jnp.sqrt(jnp.sum(kv_cn * kv_cn, axis=1, keepdims=True))  # (TB, 1, TN)
    dot = jnp.sum(kv_cn * q_cn, axis=1, keepdims=True)                # (TB, 1, TN)

    # Cosine similarity; eps is added to each norm (matches torch.norm(..)+1e-12).
    # Exact divide on a tiny (TB, 1, TN) column — approx reciprocal would drift
    # past the 1e-5 verification tolerance. Kept off the MXU on purpose.
    attn = dot / ((k_norm + eps) * (q_norm + eps))                    # (TB, 1, TN)

    # repeat_interleave(attn, C, -1) with a single query token == broadcast over C.
    out_cn = attn * kv_cn                                             # (TB, C, TN)

    # Single in-VMEM (XLU) transpose to the token-major output layout.
    o_ref[...] = jnp.transpose(out_cn, (0, 2, 1)).astype(o_ref.dtype)


def _choose_tiles(B, C, N, itemsize, budget_bytes):
    """Pick (TB, TN) batch / token tile sizes.

    `budget_bytes` bounds the combined x2-input + output bytes of ONE block.
    The pipeline double-buffers both and the kernel holds ~2 more f32
    intermediates of the same footprint, so a few MiB keeps the total well
    inside the smallest default scoped-VMEM limit (16 MiB on v5e; 32 MiB on
    v6e/v7x) without touching vmem_limit_bytes.
    """
    def block_bytes(tb, tn):
        return 2 * tb * C * tn * itemsize

    tn = N
    if block_bytes(1, N) > budget_bytes:
        # (8,128) rule: a partial last dim of the x2 block must be a multiple
        # of 128 (and divide N so every block is full).
        cands = [t for t in range(128, N, 128)
                 if N % t == 0 and block_bytes(1, t) <= budget_bytes]
        if cands:
            tn = max(cands)
        # TODO(synk): else fall back to a full-N block; very large, oddly
        # factored N*C could still exceed the scoped VMEM limit.

    tb = 1
    for cand in range(B, 1, -1):
        if B % cand == 0 and block_bytes(cand, tn) <= budget_bytes:
            tb = cand
            break
    return tb, tn


def attention_st(x1, x2, *, block_budget_bytes=4 * 1024 * 1024):
    B, C, N1 = x1.shape
    B2, C2, N = x2.shape
    assert (B, C) == (B2, C2)
    assert N1 == 1, "PyTorch forward only broadcasts when x_1 has a single token"

    TB, TN = _choose_tiles(B, C, N, jnp.dtype(x2.dtype).itemsize,
                           block_budget_bytes)
    grid = (B // TB, N // TN)

    return pl.pallas_call(
        attention_st_kernel,
        out_shape=jax.ShapeDtypeStruct((B, N, C), x2.dtype),
        grid_spec=pltpu.PrefetchScalarGridSpec(
            num_scalar_prefetch=0,
            grid=grid,
            in_specs=[
                # x1's block index depends only on the batch axis -> it is not
                # re-fetched per token tile.
                pl.BlockSpec((TB, C, 1), lambda b, n: (b, 0, 0)),
                # x2 streamed in its native channel-first layout — no HBM
                # transpose in the wrapper.
                pl.BlockSpec((TB, C, TN), lambda b, n: (b, 0, n)),
            ],
            out_specs=pl.BlockSpec((TB, TN, C), lambda b, n: (b, n, 0)),
        ),
        compiler_params=pltpu.CompilerParams(
            # Both axes are independent; on v7x this shards across the 2 TCs.
            dimension_semantics=("parallel", "parallel")),
    )(x1, x2)


def init_params(key, dim, qkv_bias=False):
    # Parameters declared in AttentionST.__init__ (unused by forward, kept for parity).
    k1, k2 = jax.random.split(key, 2)
    params = {
        "qkv_w": jax.random.normal(k1, (3 * dim, dim), jnp.float32) * 0.02,
        "proj_w": jax.random.normal(k2, (dim, dim), jnp.float32) * 0.02,
        "proj_b": jnp.zeros((dim,), jnp.float32),
    }
    if qkv_bias:
        params["qkv_b"] = jnp.zeros((3 * dim,), jnp.float32)
    return params


def reference(x1, x2):
    # Pure-JAX transcription of the PyTorch forward, for verification.
    q = jnp.swapaxes(x1, -1, -2)
    q = q / (jnp.linalg.norm(q, ord=2, axis=-1, keepdims=True) + 1e-12)
    k = jnp.swapaxes(x2, -1, -2)
    k = k / (jnp.linalg.norm(k, ord=2, axis=-1, keepdims=True) + 1e-12)
    v = x2
    attn = jnp.matmul(k, jnp.swapaxes(q, -1, -2),
                      precision=jax.lax.Precision.HIGHEST)   # (B, N, 1)
    attn = jnp.repeat(attn, k.shape[2], axis=-1)             # repeat_interleave
    return attn * jnp.swapaxes(v, -1, -2)


if __name__ == "__main__":
    key = jax.random.PRNGKey(0)
    kx1, kx2, kp = jax.random.split(key, 3)

    # dim=128 (num_heads=8 -> head_dim=16), 128 feature tokens, batch 2.
    # C is a multiple of 128 so the (B, N, C) output stores are lane-dense.
    B, C, N = 2, 128, 128
    _ = init_params(kp, C)       # declared-but-unused params, module parity only

    x1 = jax.random.normal(kx1, (B, C, 1), jnp.float32)   # single state token
    x2 = jax.random.normal(kx2, (B, C, N), jnp.float32)   # N feature tokens

    out = jax.block_until_ready(attention_st(x1, x2))
    ref = reference(x1, x2)

    assert out.shape == (B, N, C)
    assert jnp.allclose(out, ref, atol=1e-5, rtol=1e-5)
    print("KERNEL_OK")
</pallas_src>

<mosaic_0001>
module attributes {stable_mosaic.version = 11 : i64} {
  func.func @attention_st_kernel(%arg0: i32, %arg1: i32, %arg2: memref<2x128x1xf32, #tpu.memory_space<vmem>>, %arg3: memref<2x128x128xf32, #tpu.memory_space<vmem>>, %arg4: memref<2x128x128xf32, #tpu.memory_space<vmem>>) attributes {dimension_semantics = [#tpu.dimension_semantics<parallel>, #tpu.dimension_semantics<parallel>], iteration_bounds = array<i64: 1, 1>, scalar_prefetch = 0 : i64, scratch_operands = 0 : i64, tpu.core_type = #tpu.core_type<tc>, window_params = [{transform_indices = @transform_0, window_bounds = array<i64: 2, 128, 1>}, {transform_indices = @transform_1, window_bounds = array<i64: 2, 128, 128>}, {transform_indices = @transform_2, window_bounds = array<i64: 2, 128, 128>}]} {
    %c0 = arith.constant 0 : index
    %c0_0 = arith.constant 0 : index
    %c0_1 = arith.constant 0 : index
    %0 = vector.load %arg2[%c0, %c0_0, %c0_1] : memref<2x128x1xf32, #tpu.memory_space<vmem>>, vector<2x128x1xf32>
    %c0_2 = arith.constant 0 : index
    %c0_3 = arith.constant 0 : index
    %c0_4 = arith.constant 0 : index
    %1 = vector.load %arg3[%c0_2, %c0_3, %c0_4] : memref<2x128x128xf32, #tpu.memory_space<vmem>>, vector<2x128x128xf32>
    %2 = arith.mulf %0, %0 : vector<2x128x1xf32>
    %cst = arith.constant dense<0.000000e+00> : vector<2x1xf32>
    %3 = vector.multi_reduction <add>, %2, %cst [1] : vector<2x128x1xf32> to vector<2x1xf32>
    %4 = vector.shape_cast %3 : vector<2x1xf32> to vector<2x1x1xf32>
    %5 = math.sqrt %4 : vector<2x1x1xf32>
    %6 = arith.mulf %1, %1 : vector<2x128x128xf32>
    %cst_5 = arith.constant dense<0.000000e+00> : vector<2x128xf32>
    %7 = vector.multi_reduction <add>, %6, %cst_5 [1] : vector<2x128x128xf32> to vector<2x128xf32>
    %8 = vector.shape_cast %7 : vector<2x128xf32> to vector<2x1x128xf32>
    %9 = math.sqrt %8 : vector<2x1x128xf32>
    %10 = vector.broadcast %0 : vector<2x128x1xf32> to vector<2x128x128xf32>
    %11 = arith.mulf %1, %10 : vector<2x128x128xf32>
    %cst_6 = arith.constant dense<0.000000e+00> : vector<2x128xf32>
    %12 = vector.multi_reduction <add>, %11, %cst_6 [1] : vector<2x128x128xf32> to vector<2x128xf32>
    %13 = vector.shape_cast %12 : vector<2x128xf32> to vector<2x1x128xf32>
    %cst_7 = arith.constant 9.99999996E-13 : f32
    %14 = vector.broadcast %cst_7 : f32 to vector<2x1x128xf32>
    %15 = arith.addf %9, %14 : vector<2x1x128xf32>
    %cst_8 = arith.constant 9.99999996E-13 : f32
    %16 = vector.broadcast %cst_8 : f32 to vector<2x1x1xf32>
    %17 = arith.addf %5, %16 : vector<2x1x1xf32>
    %18 = vector.broadcast %17 : vector<2x1x1xf32> to vector<2x1x128xf32>
    %19 = arith.mulf %15, %18 : vector<2x1x128xf32>
    %20 = arith.divf %13, %19 : vector<2x1x128xf32>
    %21 = vector.broadcast %20 : vector<2x1x128xf32> to vector<2x128x128xf32>
    %22 = arith.mulf %21, %1 : vector<2x128x128xf32>
    %23 = tpu.transpose %22, [0, 2, 1] : vector<2x128x128xf32> -> vector<2x128x128xf32>
    %c0_9 = arith.constant 0 : index
    %c0_10 = arith.constant 0 : index
    %c0_11 = arith.constant 0 : index
    %24 = vector.load %arg4[%c0_9, %c0_10, %c0_11] : memref<2x128x128xf32, #tpu.memory_space<vmem>>, vector<2x128x128xf32>
    tpu.vector_store %arg4[%c0_9, %c0_10, %c0_11], %23 {strides = array<i32>} : memref<2x128x128xf32, #tpu.memory_space<vmem>>, vector<2x128x128xf32>,
    return
  }
  func.func @transform_0(%arg0: i32, %arg1: i32) -> (i32, i32, i32) {
    %c0_i32 = arith.constant 0 : i32
    %c0_i32_0 = arith.constant 0 : i32
    %c0_i32_1 = arith.constant 0 : i32
    return %arg0, %c0_i32, %c0_i32_0 : i32, i32, i32
  }
  func.func @transform_1(%arg0: i32, %arg1: i32) -> (i32, i32, i32) {
    %c0_i32 = arith.constant 0 : i32
    %c0_i32_0 = arith.constant 0 : i32
    return %arg0, %c0_i32, %arg1 : i32, i32, i32
  }
  func.func @transform_2(%arg0: i32, %arg1: i32) -> (i32, i32, i32) {
    %c0_i32 = arith.constant 0 : i32
    %c0_i32_0 = arith.constant 0 : i32
    return %arg0, %arg1, %c0_i32 : i32, i32, i32
  }
}

</mosaic_0001>

<llo_original>
// kernel: tpu_custom_call.1
$region0: #{tpu_custom_call.1}
  #allocation0 [shape = 'u32[]', space=smem, size = 0x4, offset = 0x4, fixed_abs, tag = 'smem constant byte address 0x4 - core index']
  #allocation1 [shape = 'u32[144,128]{1,0:T(1,128)}', space=vmem, size = 0x12000, scoped, tag = 'internal scratch']
  %s0 = inlined_call_operand.vmem [shape: f32[2,128,1], index: 0, kind: input, shape index: {}]
  %s1 = inlined_call_operand.vmem [shape: f32[2,128,128], index: 1, kind: input, shape index: {}]
  %s2 = inlined_call_operand.hbm [shape: f32[2,128,128], index: 2, kind: output, shape index: {}]
  %s3 = sld [smem:[#allocation0]]
  $region18: #{tpu_custom_call.1} parent=0
    _
  %s5 = ssub.s32 1, %s3
  %s6 = scalar_select 0, %s5, %s3
  $region1: #{tpu_custom_call.1} parent=0
    #allocation2 [shape = 'u8[131072]{0}', space=vmem, size = 0x20000, scoped, tag = 'output window, operand 0, single buffered']
    #allocation3 [shape = 's32[1]{0}', space=sflag, size = 0x4, scoped, tag = 'scoped memory for tpu_custom_call.1']
    %7 = vsyncpa [#allocation3], 0
    // Predicated region
    $region2: #{tpu_custom_call.1} parent=1 // pred_check
      _
    $region3: #{tpu_custom_call.1} parent=1 // pred_check_branch
      %9 = sbr.rel (0) target = $region5
    $region4: #{tpu_custom_call.1} parent=1 // pred_region
      _
    $region5: #{tpu_custom_call.1} parent=1 // pred_fallthru
      _
    // Predicated region
    $region6: #{tpu_custom_call.1} parent=1 // pred_check
      _
    $region7: #{tpu_custom_call.1} parent=1 // pred_check_branch
      %11 = sbr.rel (0) target = $region9
    $region8: #{tpu_custom_call.1} parent=1 // pred_region
      _
    $region9: #{tpu_custom_call.1} parent=1 // pred_fallthru
      _
    %v12 = vld [vmem:[%s0] sm:$0xff]
    %v13 = vld [vmem:[%s0 + $0x8] sm:$0xff]
    %v14 = vld [vmem:[%s0 + $0x10] sm:$0xff]
    %v15 = vld [vmem:[%s0 + $0x18] sm:$0xff]
    %v16 = vld [vmem:[%s0 + $0x20] sm:$0xff]
    %v17 = vld [vmem:[%s0 + $0x28] sm:$0xff]
    %v18 = vld [vmem:[%s0 + $0x30] sm:$0xff]
    %v19 = vld [vmem:[%s0 + $0x38] sm:$0xff]
    %v20 = vld [vmem:[%s0 + $0x40] sm:$0xff]
    %v21 = vld [vmem:[%s0 + $0x48] sm:$0xff]
    %v22 = vld [vmem:[%s0 + $0x50] sm:$0xff]
    %v23 = vld [vmem:[%s0 + $0x58] sm:$0xff]
    %v24 = vld [vmem:[%s0 + $0x60] sm:$0xff]
    %v25 = vld [vmem:[%s0 + $0x68] sm:$0xff]
    %v26 = vld [vmem:[%s0 + $0x70] sm:$0xff]
    %v27 = vld [vmem:[%s0 + $0x78] sm:$0xff]
    %v28 = vld [vmem:[%s0 + $0x80] sm:$0xff]
    %v29 = vld [vmem:[%s0 + $0x88] sm:$0xff]
    %v30 = vld [vmem:[%s0 + $0x90] sm:$0xff]
    %v31 = vld [vmem:[%s0 + $0x98] sm:$0xff]
    %v32 = vld [vmem:[%s0 + $0xa0] sm:$0xff]
    %v33 = vld [vmem:[%s0 + $0xa8] sm:$0xff]
    %v34 = vld [vmem:[%s0 + $0xb0] sm:$0xff]
    %v35 = vld [vmem:[%s0 + $0xb8] sm:$0xff]
    %v36 = vld [vmem:[%s0 + $0xc0] sm:$0xff]
    %v37 = vld [vmem:[%s0 + $0xc8] sm:$0xff]
    %v38 = vld [vmem:[%s0 + $0xd0] sm:$0xff]
    %v39 = vld [vmem:[%s0 + $0xd8] sm:$0xff]
    %v40 = vld [vmem:[%s0 + $0xe0] sm:$0xff]
    %v41 = vld [vmem:[%s0 + $0xe8] sm:$0xff]
    %v42 = vld [vmem:[%s0 + $0xf0] sm:$0xff]
    %v43 = vld [vmem:[%s0 + $0xf8] sm:$0xff]
    %v44 = vld [vmem:[%s1] sm:$0xff]
    %v45 = vld [vmem:[%s1 + $0x8] sm:$0xff]
    %v46 = vld [vmem:[%s1 + $0x10] sm:$0xff]
    %v47 = vld [vmem:[%s1 + $0x18] sm:$0xff]
    %v48 = vld [vmem:[%s1 + $0x20] sm:$0xff]
    %v49 = vld [vmem:[%s1 + $0x28] sm:$0xff]
    %v50 = vld [vmem:[%s1 + $0x30] sm:$0xff]
    %v51 = vld [vmem:[%s1 + $0x38] sm:$0xff]
    %v52 = vld [vmem:[%s1 + $0x40] sm:$0xff]
    %v53 = vld [vmem:[%s1 + $0x48] sm:$0xff]
    %v54 = vld [vmem:[%s1 + $0x50] sm:$0xff]
    %v55 = vld [vmem:[%s1 + $0x58] sm:$0xff]
    %v56 = vld [vmem:[%s1 + $0x60] sm:$0xff]
    %v57 = vld [vmem:[%s1 + $0x68] sm:$0xff]
    %v58 = vld [vmem:[%s1 + $0x70] sm:$0xff]
    %v59 = vld [vmem:[%s1 + $0x78] sm:$0xff]
    %v60 = vld [vmem:[%s1 + $0x80] sm:$0xff]
    %v61 = vld [vmem:[%s1 + $0x88] sm:$0xff]
    %v62 = vld [vmem:[%s1 + $0x90] sm:$0xff]
    %v63 = vld [vmem:[%s1 + $0x98] sm:$0xff]
    %v64 = vld [vmem:[%s1 + $0xa0] sm:$0xff]
    %v65 = vld [vmem:[%s1 + $0xa8] sm:$0xff]
    %v66 = vld [vmem:[%s1 + $0xb0] sm:$0xff]
    %v67 = vld [vmem:[%s1 + $0xb8] sm:$0xff]
    %v68 = vld [vmem:[%s1 + $0xc0] sm:$0xff]
    %v69 = vld [vmem:[%s1 + $0xc8] sm:$0xff]
    %v70 = vld [vmem:[%s1 + $0xd0] sm:$0xff]
    %v71 = vld [vmem:[%s1 + $0xd8] sm:$0xff]
    %v72 = vld [vmem:[%s1 + $0xe0] sm:$0xff]
    %v73 = vld [vmem:[%s1 + $0xe8] sm:$0xff]
    %v74 = vld [vmem:[%s1 + $0xf0] sm:$0xff]
    %v75 = vld [vmem:[%s1 + $0xf8] sm:$0xff]
    %v76 = vmul.f32 %v12, %v12
    %v77 = vmul.f32 %v13, %v13
    %v78 = vmul.f32 %v14, %v14
    %v79 = vmul.f32 %v15, %v15
    %v80 = vmul.f32 %v16, %v16
    %v81 = vmul.f32 %v17, %v17
    %v82 = vmul.f32 %v18, %v18
    %v83 = vmul.f32 %v19, %v19
    %v84 = vmul.f32 %v20, %v20
    %v85 = vmul.f32 %v21, %v21
    %v86 = vmul.f32 %v22, %v22
    %v87 = vmul.f32 %v23, %v23
    %v88 = vmul.f32 %v24, %v24
    %v89 = vmul.f32 %v25, %v25
    %v90 = vmul.f32 %v26, %v26
    %v91 = vmul.f32 %v27, %v27
    %v92 = vmul.f32 %v28, %v28
    %v93 = vmul.f32 %v29, %v29
    %v94 = vmul.f32 %v30, %v30
    %v95 = vmul.f32 %v31, %v31
    %v96 = vmul.f32 %v32, %v32
    %v97 = vmul.f32 %v33, %v33
    %v98 = vmul.f32 %v34, %v34
    %v99 = vmul.f32 %v35, %v35
    %v100 = vmul.f32 %v36, %v36
    %v101 = vmul.f32 %v37, %v37
    %v102 = vmul.f32 %v38, %v38
    %v103 = vmul.f32 %v39, %v39
    %v104 = vmul.f32 %v40, %v40
    %v105 = vmul.f32 %v41, %v41
    %v106 = vmul.f32 %v42, %v42
    %v107 = vmul.f32 %v43, %v43
    %vm108 = vcmask 7168
    %v109 = vsel %vm108, %v76, 0.0
    %v110 = vsel %vm108, %v77, 0.0
    %v111 = vadd.f32 %v109, %v110
    %v112 = vsel %vm108, %v78, 0.0
    %v113 = vadd.f32 %v111, %v112
    %v114 = vsel %vm108, %v79, 0.0
    %v115 = vadd.f32 %v113, %v114
    %v116 = vsel %vm108, %v80, 0.0
    %v117 = vadd.f32 %v115, %v116
    %v118 = vsel %vm108, %v81, 0.0
    %v119 = vadd.f32 %v117, %v118
    %v120 = vsel %vm108, %v82, 0.0
    %v121 = vadd.f32 %v119, %v120
    %v122 = vsel %vm108, %v83, 0.0
    %v123 = vadd.f32 %v121, %v122
    %v124 = vsel %vm108, %v84, 0.0
    %v125 = vadd.f32 %v123, %v124
    %v126 = vsel %vm108, %v85, 0.0
    %v127 = vadd.f32 %v125, %v126
    %v128 = vsel %vm108, %v86, 0.0
    %v129 = vadd.f32 %v127, %v128
    %v130 = vsel %vm108, %v87, 0.0
    %v131 = vadd.f32 %v129, %v130
    %v132 = vsel %vm108, %v88, 0.0
    %v133 = vadd.f32 %v131, %v132
    %v134 = vsel %vm108, %v89, 0.0
    %v135 = vadd.f32 %v133, %v134
    %v136 = vsel %vm108, %v90, 0.0
    %v137 = vadd.f32 %v135, %v136
    %v138 = vsel %vm108, %v91, 0.0
    %v139 = vadd.f32 %v137, %v138
    %v140 = vrot.slane %v139, 4
    %v141 = vadd.f32 %v139, %v140
    %v142 = vrot.slane %v141, 2
    %v143 = vadd.f32 %v141, %v142
    %v144 = vrot.slane %v143, 1
    %v145 = vadd.f32 %v143, %v144
    %v146 = vsel %vm108, %v92, 0.0
    %v147 = vsel %vm108, %v93, 0.0
    %v148 = vadd.f32 %v146, %v147
    %v149 = vsel %vm108, %v94, 0.0
    %v150 = vadd.f32 %v148, %v149
    %v151 = vsel %vm108, %v95, 0.0
    %v152 = vadd.f32 %v150, %v151
    %v153 = vsel %vm108, %v96, 0.0
    %v154 = vadd.f32 %v152, %v153
    %v155 = vsel %vm108, %v97, 0.0
    %v156 = vadd.f32 %v154, %v155
    %v157 = vsel %vm108, %v98, 0.0
    %v158 = vadd.f32 %v156, %v157
    %v159 = vsel %vm108, %v99, 0.0
    %v160 = vadd.f32 %v158, %v159
    %v161 = vsel %vm108, %v100, 0.0
    %v162 = vadd.f32 %v160, %v161
    %v163 = vsel %vm108, %v101, 0.0
    %v164 = vadd.f32 %v162, %v163
    %v165 = vsel %vm108, %v102, 0.0
    %v166 = vadd.f32 %v164, %v165
    %v167 = vsel %vm108, %v103, 0.0
    %v168 = vadd.f32 %v166, %v167
    %v169 = vsel %vm108, %v104, 0.0
    %v170 = vadd.f32 %v168, %v169
    %v171 = vsel %vm108, %v105, 0.0
    %v172 = vadd.f32 %v170, %v171
    %v173 = vsel %vm108, %v106, 0.0
    %v174 = vadd.f32 %v172, %v173
    %v175 = vsel %vm108, %v107, 0.0
    %v176 = vadd.f32 %v174, %v175
    %v177 = vrot.slane %v176, 4
    %v178 = vadd.f32 %v176, %v177
    %v179 = vrot.slane %v178, 2
    %v180 = vadd.f32 %v178, %v179
    %v181 = vrot.slane %v180, 1
    %v182 = vadd.f32 %v180, %v181
    %v183 = vrsqrt.pop %v145
    %v184 = vmul.f32 %v145, %v183
    %vm185 = vcmp.eq.f32.partialorder %v145, inf
    %v186 = vsel %vm185, %v145, %v184
    %vm187 = vcmp.eq.f32.partialorder %v145, 0.0
    %v188 = vand.u32 %v145, 2147483648
    %v189 = vsel %vm187, %v188, %v186
    %v190 = vrsqrt.pop %v182
    %v191 = vmul.f32 %v182, %v190
    %vm192 = vcmp.eq.f32.partialorder %v182, inf
    %v193 = vsel %vm192, %v182, %v191
    %vm194 = vcmp.eq.f32.partialorder %v182, 0.0
    %v195 = vand.u32 %v182, 2147483648
    %v196 = vsel %vm194, %v195, %v193
    %v197 = vmul.f32 %v44, %v44
    %v198 = vmul.f32 %v45, %v45
    %v199 = vmul.f32 %v46, %v46
    %v200 = vmul.f32 %v47, %v47
    %v201 = vmul.f32 %v48, %v48
    %v202 = vmul.f32 %v49, %v49
    %v203 = vmul.f32 %v50, %v50
    %v204 = vmul.f32 %v51, %v51
    %v205 = vmul.f32 %v52, %v52
    %v206 = vmul.f32 %v53, %v53
    %v207 = vmul.f32 %v54, %v54
    %v208 = vmul.f32 %v55, %v55
    %v209 = vmul.f32 %v56, %v56
    %v210 = vmul.f32 %v57, %v57
    %v211 = vmul.f32 %v58, %v58
    %v212 = vmul.f32 %v59, %v59
    %v213 = vmul.f32 %v60, %v60
    %v214 = vmul.f32 %v61, %v61
    %v215 = vmul.f32 %v62, %v62
    %v216 = vmul.f32 %v63, %v63
    %v217 = vmul.f32 %v64, %v64
    %v218 = vmul.f32 %v65, %v65
    %v219 = vmul.f32 %v66, %v66
    %v220 = vmul.f32 %v67, %v67
    %v221 = vmul.f32 %v68, %v68
    %v222 = vmul.f32 %v69, %v69
    %v223 = vmul.f32 %v70, %v70
    %v224 = vmul.f32 %v71, %v71
    %v225 = vmul.f32 %v72, %v72
    %v226 = vmul.f32 %v73, %v73
    %v227 = vmul.f32 %v74, %v74
    %v228 = vmul.f32 %v75, %v75
    %v229 = vadd.f32 %v197, %v198
    %v230 = vadd.f32 %v229, %v199
    %v231 = vadd.f32 %v230, %v200
    %v232 = vadd.f32 %v231, %v201
    %v233 = vadd.f32 %v232, %v202
    %v234 = vadd.f32 %v233, %v203
    %v235 = vadd.f32 %v234, %v204
    %v236 = vadd.f32 %v235, %v205
    %v237 = vadd.f32 %v236, %v206
    %v238 = vadd.f32 %v237, %v207
    %v239 = vadd.f32 %v238, %v208
    %v240 = vadd.f32 %v239, %v209
    %v241 = vadd.f32 %v240, %v210
    %v242 = vadd.f32 %v241, %v211
    %v243 = vadd.f32 %v242, %v212
    %v244 = vrot.slane %v243, 4
    %v245 = vadd.f32 %v243, %v244
    %v246 = vrot.slane %v245, 2
    %v247 = vadd.f32 %v245, %v246
    %v248 = vrot.slane %v247, 1
    %v249 = vadd.f32 %v247, %v248
    %v250 = vadd.f32 %v213, %v214
    %v251 = vadd.f32 %v250, %v215
    %v252 = vadd.f32 %v251, %v216
    %v253 = vadd.f32 %v252, %v217
    %v254 = vadd.f32 %v253, %v218
    %v255 = vadd.f32 %v254, %v219
    %v256 = vadd.f32 %v255, %v220
    %v257 = vadd.f32 %v256, %v221
    %v258 = vadd.f32 %v257, %v222
    %v259 = vadd.f32 %v258, %v223
    %v260 = vadd.f32 %v259, %v224
    %v261 = vadd.f32 %v260, %v225
    %v262 = vadd.f32 %v261, %v226
    %v263 = vadd.f32 %v262, %v227
    %v264 = vadd.f32 %v263, %v228
    %v265 = vrot.slane %v264, 4
    %v266 = vadd.f32 %v264, %v265
    %v267 = vrot.slane %v266, 2
    %v268 = vadd.f32 %v266, %v267
    %v269 = vrot.slane %v268, 1
    %v270 = vadd.f32 %v268, %v269
    %v271 = vrsqrt.pop %v249
    %v272 = vmul.f32 %v249, %v271
    %vm273 = vcmp.eq.f32.partialorder %v249, inf
    %v274 = vsel %vm273, %v249, %v272
    %vm275 = vcmp.eq.f32.partialorder %v249, 0.0
    %v276 = vand.u32 %v249, 2147483648
    %v277 = vsel %vm275, %v276, %v274
    %v278 = vrsqrt.pop %v270
    %v279 = vmul.f32 %v270, %v278
    %vm280 = vcmp.eq.f32.partialorder %v270, inf
    %v281 = vsel %vm280, %v270, %v279
    %vm282 = vcmp.eq.f32.partialorder %v270, 0.0
    %v283 = vand.u32 %v270, 2147483648
    %v284 = vsel %vm282, %v283, %v281
    %286 = vset.pattern.permute.xlu0 0
    %287 = vperm.xlu0 %286, %v12
    %v288 = vpop.permute.xlu0 %287
    %291 = vset.pattern.permute.xlu0 0
    %292 = vperm.xlu0 %291, %v13
    %v293 = vpop.permute.xlu0 %292
    %296 = vset.pattern.permute.xlu0 0
    %297 = vperm.xlu0 %296, %v14
    %v298 = vpop.permute.xlu0 %297
    %301 = vset.pattern.permute.xlu0 0
    %302 = vperm.xlu0 %301, %v15
    %v303 = vpop.permute.xlu0 %302
    %306 = vset.pattern.permute.xlu0 0
    %307 = vperm.xlu0 %306, %v16
    %v308 = vpop.permute.xlu0 %307
    %311 = vset.pattern.permute.xlu0 0
    %312 = vperm.xlu0 %311, %v17
    %v313 = vpop.permute.xlu0 %312
    %316 = vset.pattern.permute.xlu0 0
    %317 = vperm.xlu0 %316, %v18
    %v318 = vpop.permute.xlu0 %317
    %321 = vset.pattern.permute.xlu0 0
    %322 = vperm.xlu0 %321, %v19
    %v323 = vpop.permute.xlu0 %322
    %326 = vset.pattern.permute.xlu0 0
    %327 = vperm.xlu0 %326, %v20
    %v328 = vpop.permute.xlu0 %327
    %331 = vset.pattern.permute.xlu0 0
    %332 = vperm.xlu0 %331, %v21
    %v333 = vpop.permute.xlu0 %332
    %336 = vset.pattern.permute.xlu0 0
    %337 = vperm.xlu0 %336, %v22
    %v338 = vpop.permute.xlu0 %337
    %341 = vset.pattern.permute.xlu0 0
    %342 = vperm.xlu0 %341, %v23
    %v343 = vpop.permute.xlu0 %342
    %346 = vset.pattern.permute.xlu0 0
    %347 = vperm.xlu0 %346, %v24
    %v348 = vpop.permute.xlu0 %347
    %351 = vset.pattern.permute.xlu0 0
    %352 = vperm.xlu0 %351, %v25
    %v353 = vpop.permute.xlu0 %352
    %356 = vset.pattern.permute.xlu0 0
    %357 = vperm.xlu0 %356, %v26
    %v358 = vpop.permute.xlu0 %357
    %361 = vset.pattern.permute.xlu0 0
    %362 = vperm.xlu0 %361, %v27
    %v363 = vpop.permute.xlu0 %362
    %366 = vset.pattern.permute.xlu0 0
    %367 = vperm.xlu0 %366, %v28
    %v368 = vpop.permute.xlu0 %367
    %371 = vset.pattern.permute.xlu0 0
    %372 = vperm.xlu0 %371, %v29
    %v373 = vpop.permute.xlu0 %372
    %376 = vset.pattern.permute.xlu0 0
    %377 = vperm.xlu0 %376, %v30
    %v378 = vpop.permute.xlu0 %377
    %381 = vset.pattern.permute.xlu0 0
    %382 = vperm.xlu0 %381, %v31
    %v383 = vpop.permute.xlu0 %382
    %386 = vset.pattern.permute.xlu0 0
    %387 = vperm.xlu0 %386, %v32
    %v388 = vpop.permute.xlu0 %387
    %391 = vset.pattern.permute.xlu0 0
    %392 = vperm.xlu0 %391, %v33
    %v393 = vpop.permute.xlu0 %392
    %396 = vset.pattern.permute.xlu0 0
    %397 = vperm.xlu0 %396, %v34
    %v398 = vpop.permute.xlu0 %397
    %401 = vset.pattern.permute.xlu0 0
    %402 = vperm.xlu0 %401, %v35
    %v403 = vpop.permute.xlu0 %402
    %406 = vset.pattern.permute.xlu0 0
    %407 = vperm.xlu0 %406, %v36
    %v408 = vpop.permute.xlu0 %407
    %411 = vset.pattern.permute.xlu0 0
    %412 = vperm.xlu0 %411, %v37
    %v413 = vpop.permute.xlu0 %412
    %416 = vset.pattern.permute.xlu0 0
    %417 = vperm.xlu0 %416, %v38
    %v418 = vpop.permute.xlu0 %417
    %421 = vset.pattern.permute.xlu0 0
    %422 = vperm.xlu0 %421, %v39
    %v423 = vpop.permute.xlu0 %422
    %426 = vset.pattern.permute.xlu0 0
    %427 = vperm.xlu0 %426, %v40
    %v428 = vpop.permute.xlu0 %427
    %431 = vset.pattern.permute.xlu0 0
    %432 = vperm.xlu0 %431, %v41
    %v433 = vpop.permute.xlu0 %432
    %436 = vset.pattern.permute.xlu0 0
    %437 = vperm.xlu0 %436, %v42
    %v438 = vpop.permute.xlu0 %437
    %441 = vset.pattern.permute.xlu0 0
    %442 = vperm.xlu0 %441, %v43
    %v443 = vpop.permute.xlu0 %442
    %v445 = vmul.f32 %v44, %v288
    %v446 = vmul.f32 %v45, %v293
    %v447 = vmul.f32 %v46, %v298
    %v448 = vmul.f32 %v47, %v303
    %v449 = vmul.f32 %v48, %v308
    %v450 = vmul.f32 %v49, %v313
    %v451 = vmul.f32 %v50, %v318
    %v452 = vmul.f32 %v51, %v323
    %v453 = vmul.f32 %v52, %v328
    %v454 = vmul.f32 %v53, %v333
    %v455 = vmul.f32 %v54, %v338
    %v456 = vmul.f32 %v55, %v343
    %v457 = vmul.f32 %v56, %v348
    %v458 = vmul.f32 %v57, %v353
    %v459 = vmul.f32 %v58, %v358
    %v460 = vmul.f32 %v59, %v363
    %v461 = vmul.f32 %v60, %v368
    %v462 = vmul.f32 %v61, %v373
    %v463 = vmul.f32 %v62, %v378
    %v464 = vmul.f32 %v63, %v383
    %v465 = vmul.f32 %v64, %v388
    %v466 = vmul.f32 %v65, %v393
    %v467 = vmul.f32 %v66, %v398
    %v468 = vmul.f32 %v67, %v403
    %v469 = vmul.f32 %v68, %v408
    %v470 = vmul.f32 %v69, %v413
    %v471 = vmul.f32 %v70, %v418
    %v472 = vmul.f32 %v71, %v423
    %v473 = vmul.f32 %v72, %v428
    %v474 = vmul.f32 %v73, %v433
    %v475 = vmul.f32 %v74, %v438
    %v476 = vmul.f32 %v75, %v443
    %v477 = vadd.f32 %v445, %v446
    %v478 = vadd.f32 %v477, %v447
    %v479 = vadd.f32 %v478, %v448
    %v480 = vadd.f32 %v479, %v449
    %v481 = vadd.f32 %v480, %v450
    %v482 = vadd.f32 %v481, %v451
    %v483 = vadd.f32 %v482, %v452
    %v484 = vadd.f32 %v483, %v453
    %v485 = vadd.f32 %v484, %v454
    %v486 = vadd.f32 %v485, %v455
    %v487 = vadd.f32 %v486, %v456
    %v488 = vadd.f32 %v487, %v457
    %v489 = vadd.f32 %v488, %v458
    %v490 = vadd.f32 %v489, %v459
    %v491 = vadd.f32 %v490, %v460
    %v492 = vrot.slane %v491, 4
    %v493 = vadd.f32 %v491, %v492
    %v494 = vrot.slane %v493, 2
    %v495 = vadd.f32 %v493, %v494
    %v496 = vrot.slane %v495, 1
    %v497 = vadd.f32 %v495, %v496
    %v498 = vadd.f32 %v461, %v462
    %v499 = vadd.f32 %v498, %v463
    %v500 = vadd.f32 %v499, %v464
    %v501 = vadd.f32 %v500, %v465
    %v502 = vadd.f32 %v501, %v466
    %v503 = vadd.f32 %v502, %v467
    %v504 = vadd.f32 %v503, %v468
    %v505 = vadd.f32 %v504, %v469
    %v506 = vadd.f32 %v505, %v470
    %v507 = vadd.f32 %v506, %v471
    %v508 = vadd.f32 %v507, %v472
    %v509 = vadd.f32 %v508, %v473
    %v510 = vadd.f32 %v509, %v474
    %v511 = vadd.f32 %v510, %v475
    %v512 = vadd.f32 %v511, %v476
    %v513 = vrot.slane %v512, 4
    %v514 = vadd.f32 %v512, %v513
    %v515 = vrot.slane %v514, 2
    %v516 = vadd.f32 %v514, %v515
    %v517 = vrot.slane %v516, 1
    %v518 = vadd.f32 %v516, %v517
    %v519 = vadd.f32 %v277, 1e-12
    %v520 = vadd.f32 %v284, 1e-12
    %v521 = vadd.f32 %v189, 1e-12
    %v522 = vadd.f32 %v196, 1e-12
    %524 = vset.pattern.permute.xlu0 0
    %525 = vperm.xlu0 %524, %v521
    %v526 = vpop.permute.xlu0 %525
    %529 = vset.pattern.permute.xlu0 0
    %530 = vperm.xlu0 %529, %v522
    %v531 = vpop.permute.xlu0 %530
    %v533 = vmul.f32 %v519, %v526
    %v534 = vmul.f32 %v520, %v531
    %v535 = vrcp.pop %v533
    %v536 = vmul.f32 %v497, %v535
    %v537 = vrcp.pop %v534
    %v538 = vmul.f32 %v518, %v537
    %v539 = vmul.f32 %v536, %v44
    %v540 = vmul.f32 %v536, %v45
    %v541 = vmul.f32 %v536, %v46
    %v542 = vmul.f32 %v536, %v47
    %v543 = vmul.f32 %v536, %v48
    %v544 = vmul.f32 %v536, %v49
    %v545 = vmul.f32 %v536, %v50
    %v546 = vmul.f32 %v536, %v51
    %v547 = vmul.f32 %v536, %v52
    %v548 = vmul.f32 %v536, %v53
    %v549 = vmul.f32 %v536, %v54
    %v550 = vmul.f32 %v536, %v55
    %v551 = vmul.f32 %v536, %v56
    %v552 = vmul.f32 %v536, %v57
    %v553 = vmul.f32 %v536, %v58
    %v554 = vmul.f32 %v536, %v59
    %v555 = vmul.f32 %v538, %v60
    %v556 = vmul.f32 %v538, %v61
    %v557 = vmul.f32 %v538, %v62
    %v558 = vmul.f32 %v538, %v63
    %v559 = vmul.f32 %v538, %v64
    %v560 = vmul.f32 %v538, %v65
    %v561 = vmul.f32 %v538, %v66
    %v562 = vmul.f32 %v538, %v67
    %v563 = vmul.f32 %v538, %v68
    %v564 = vmul.f32 %v538, %v69
    %v565 = vmul.f32 %v538, %v70
    %v566 = vmul.f32 %v538, %v71
    %v567 = vmul.f32 %v538, %v72
    %v568 = vmul.f32 %v538, %v73
    %v569 = vmul.f32 %v538, %v74
    %v570 = vmul.f32 %v538, %v75
    %571 = vxpose.xlu0.b32.start [1/16] %v539, 128
    %572 = vxpose.xlu0.b32.cont [2/16] %v540, 128
    %573 = vxpose.xlu0.b32.cont [3/16] %v541, 128
    %574 = vxpose.xlu0.b32.cont [4/16] %v542, 128
    %575 = vxpose.xlu0.b32.cont [5/16] %v543, 128
    %576 = vxpose.xlu0.b32.cont [6/16] %v544, 128
    %577 = vxpose.xlu0.b32.cont [7/16] %v545, 128
    %578 = vxpose.xlu0.b32.cont [8/16] %v546, 128
    %579 = vxpose.xlu0.b32.cont [9/16] %v547, 128
    %580 = vxpose.xlu0.b32.cont [10/16] %v548, 128
    %581 = vxpose.xlu0.b32.cont [11/16] %v549, 128
    %582 = vxpose.xlu0.b32.cont [12/16] %v550, 128
    %583 = vxpose.xlu0.b32.cont [13/16] %v551, 128
    %584 = vxpose.xlu0.b32.cont [14/16] %v552, 128
    %585 = vxpose.xlu0.b32.cont [15/16] %v553, 128
    %586 = vxpose.xlu0.b32.end [16/16] %v554, 128
    %v587 = vpop.trf.xlu0
    %v588 = vpop.trf.xlu0
    %v589 = vpop.trf.xlu0
    %v590 = vpop.trf.xlu0
    %v591 = vpop.trf.xlu0
    %v592 = vpop.trf.xlu0
    %v593 = vpop.trf.xlu0
    %v594 = vpop.trf.xlu0
    %v595 = vpop.trf.xlu0
    %v596 = vpop.trf.xlu0
    %v597 = vpop.trf.xlu0
    %v598 = vpop.trf.xlu0
    %v599 = vpop.trf.xlu0
    %v600 = vpop.trf.xlu0
    %v601 = vpop.trf.xlu0
    %v602 = vpop.trf.xlu0
    %603 = vxpose.xlu0.b32.start [1/16] %v555, 128
    %604 = vxpose.xlu0.b32.cont [2/16] %v556, 128
    %605 = vxpose.xlu0.b32.cont [3/16] %v557, 128
    %606 = vxpose.xlu0.b32.cont [4/16] %v558, 128
    %607 = vxpose.xlu0.b32.cont [5/16] %v559, 128
    %608 = vxpose.xlu0.b32.cont [6/16] %v560, 128
    %609 = vxpose.xlu0.b32.cont [7/16] %v561, 128
    %610 = vxpose.xlu0.b32.cont [8/16] %v562, 128
    %611 = vxpose.xlu0.b32.cont [9/16] %v563, 128
    %612 = vxpose.xlu0.b32.cont [10/16] %v564, 128
    %613 = vxpose.xlu0.b32.cont [11/16] %v565, 128
    %614 = vxpose.xlu0.b32.cont [12/16] %v566, 128
    %615 = vxpose.xlu0.b32.cont [13/16] %v567, 128
    %616 = vxpose.xlu0.b32.cont [14/16] %v568, 128
    %617 = vxpose.xlu0.b32.cont [15/16] %v569, 128
    %618 = vxpose.xlu0.b32.end [16/16] %v570, 128
    %v619 = vpop.trf.xlu0
    %v620 = vpop.trf.xlu0
    %v621 = vpop.trf.xlu0
    %v622 = vpop.trf.xlu0
    %v623 = vpop.trf.xlu0
    %v624 = vpop.trf.xlu0
    %v625 = vpop.trf.xlu0
    %v626 = vpop.trf.xlu0
    %v627 = vpop.trf.xlu0
    %v628 = vpop.trf.xlu0
    %v629 = vpop.trf.xlu0
    %v630 = vpop.trf.xlu0
    %v631 = vpop.trf.xlu0
    %v632 = vpop.trf.xlu0
    %v633 = vpop.trf.xlu0
    %v634 = vpop.trf.xlu0
    %635 = vst [vmem:[#allocation2] sm:$0xff] %v587
    %636 = vst [vmem:[#allocation2 + $0x8] sm:$0xff] %v588
    %637 = vst [vmem:[#allocation2 + $0x10] sm:$0xff] %v589
    %638 = vst [vmem:[#allocation2 + $0x18] sm:$0xff] %v590
    %639 = vst [vmem:[#allocation2 + $0x20] sm:$0xff] %v591
    %640 = vst [vmem:[#allocation2 + $0x28] sm:$0xff] %v592
    %641 = vst [vmem:[#allocation2 + $0x30] sm:$0xff] %v593
    %642 = vst [vmem:[#allocation2 + $0x38] sm:$0xff] %v594
    %643 = vst [vmem:[#allocation2 + $0x40] sm:$0xff] %v595
    %644 = vst [vmem:[#allocation2 + $0x48] sm:$0xff] %v596
    %645 = vst [vmem:[#allocation2 + $0x50] sm:$0xff] %v597
    %646 = vst [vmem:[#allocation2 + $0x58] sm:$0xff] %v598
    %647 = vst [vmem:[#allocation2 + $0x60] sm:$0xff] %v599
    %648 = vst [vmem:[#allocation2 + $0x68] sm:$0xff] %v600
    %649 = vst [vmem:[#allocation2 + $0x70] sm:$0xff] %v601
    %650 = vst [vmem:[#allocation2 + $0x78] sm:$0xff] %v602
    %651 = vst [vmem:[#allocation2 + $0x80] sm:$0xff] %v619
    %652 = vst [vmem:[#allocation2 + $0x88] sm:$0xff] %v620
    %653 = vst [vmem:[#allocation2 + $0x90] sm:$0xff] %v621
    %654 = vst [vmem:[#allocation2 + $0x98] sm:$0xff] %v622
    %655 = vst [vmem:[#allocation2 + $0xa0] sm:$0xff] %v623
    %656 = vst [vmem:[#allocation2 + $0xa8] sm:$0xff] %v624
    %657 = vst [vmem:[#allocation2 + $0xb0] sm:$0xff] %v625
    %658 = vst [vmem:[#allocation2 + $0xb8] sm:$0xff] %v626
    %659 = vst [vmem:[#allocation2 + $0xc0] sm:$0xff] %v627
    %660 = vst [vmem:[#allocation2 + $0xc8] sm:$0xff] %v628
    %661 = vst [vmem:[#allocation2 + $0xd0] sm:$0xff] %v629
    %662 = vst [vmem:[#allocation2 + $0xd8] sm:$0xff] %v630
    %663 = vst [vmem:[#allocation2 + $0xe0] sm:$0xff] %v631
    %664 = vst [vmem:[#allocation2 + $0xe8] sm:$0xff] %v632
    %665 = vst [vmem:[#allocation2 + $0xf0] sm:$0xff] %v633
    %666 = vst [vmem:[#allocation2 + $0xf8] sm:$0xff] %v634
    // Predicated region
    $region10: #{tpu_custom_call.1} parent=1 // pred_check
      _
    $region11: #{tpu_custom_call.1} parent=1 // pred_check_branch
      %668 = sbr.rel (0) target = $region13
    $region12: #{tpu_custom_call.1} parent=1 // pred_region
      %s670 = ssub.s32 4096, 4096
      %671 = vsyncadd [#allocation3], %s670
      %s672 = sshll.u32 [#allocation2], 4
      %s673 = int_to_ptr.vmem [resolvable:$true] %s672
      %678 = dma.vmem_to_hbm [thread:$0]  %s673, 4096, %s2, [#allocation3], 128, 128, 8
    $region13: #{tpu_custom_call.1} parent=1 // pred_fallthru
      _
    // Predicated region
    $region14: #{tpu_custom_call.1} parent=1 // pred_check
      _
    $region15: #{tpu_custom_call.1} parent=1 // pred_check_branch
      %680 = sbr.rel (0) target = $region17
    $region16: #{tpu_custom_call.1} parent=1 // pred_region
      %681 = dma.done [#allocation3], 4096
    $region17: #{tpu_custom_call.1} parent=1 // pred_fallthru
      _
    %682 = vsyncpa [#allocation3], 1

</llo_original>
